<compile_context>
chip_gen: v6e
topology: v6e:2x2x1
jax: 0.10.0
libtpu: 0.0.40
codegen_flags: <defaults>
</compile_context>

<pallas_src>
import functools
import math

import jax
import jax.numpy as jnp
from jax.experimental import pallas as pl
from jax.experimental.pallas import tpu as pltpu


# 32 MiB scoped VMEM: >= every generation's default, fits comfortably inside
# v7x's 64 MiB physical VMEM, and covers the largest tile budget used below
# (~17 MiB for the f32 fused-QKV kernel at tm=tn=tk=512).
_VMEM_LIMIT = 32 * 1024 * 1024


# ---------------------------------------------------------------------------
# Tile selection
# ---------------------------------------------------------------------------
def _pick_tile(dim, cap, align):
    """Largest tile <= cap that divides `dim` and is a multiple of `align`.

    Falls back to the full dimension (always a legal block shape) when no
    aligned divisor exists -- that only happens when `dim` itself is not a
    multiple of `align`, in which case the full extent is the only legal
    block anyway.  `align` is 8 for sublane-mapped dims and 128 for the
    lane-mapped (last) dim, per the TPU (8, 128) block constraint.
    """
    if dim <= cap:
        return dim
    start = cap - (cap % align)
    for t in range(start, align - 1, -align):
        if dim % t == 0:
            return t
    return dim


# ---------------------------------------------------------------------------
# Kernel 1: fused QKV projection  q/k/v = (x @ W_t + b) [* scale for q]
#   x is streamed from HBM exactly once; three f32 accumulators in VMEM.
#   The attention scale 1/sqrt(D) is folded into Q at finalize time.
# ---------------------------------------------------------------------------
def _fused_qkv_kernel(x_ref, wq_ref, wk_ref, wv_ref, bq_ref, bk_ref, bv_ref,
                      q_ref, k_ref, v_ref, accq, acck, accv, *, q_scale):
    kk = pl.program_id(2)

    @pl.when(kk == 0)
    def _():
        accq[...] = jnp.zeros_like(accq)
        acck[...] = jnp.zeros_like(acck)
        accv[...] = jnp.zeros_like(accv)

    x = x_ref[...]  # loaded once, feeds all three MXU matmuls
    accq[...] += jnp.dot(x, wq_ref[...], preferred_element_type=jnp.float32)
    acck[...] += jnp.dot(x, wk_ref[...], preferred_element_type=jnp.float32)
    accv[...] += jnp.dot(x, wv_ref[...], preferred_element_type=jnp.float32)

    @pl.when(kk == pl.num_programs(2) - 1)
    def _():
        q_ref[...] = ((accq[...] + bq_ref[...].astype(jnp.float32))
                      * q_scale).astype(q_ref.dtype)
        k_ref[...] = (acck[...] + bk_ref[...].astype(jnp.float32)).astype(k_ref.dtype)
        v_ref[...] = (accv[...] + bv_ref[...].astype(jnp.float32)).astype(v_ref.dtype)


def pallas_fused_qkv(x2d, wq_t, wk_t, wv_t, bq, bk, bv, *, q_scale=1.0,
                     tm_cap=512, tn_cap=512, tk_cap=512):
    M, K = x2d.shape
    N = wq_t.shape[1]
    tm = _pick_tile(M, tm_cap, 8)
    tn = _pick_tile(N, tn_cap, 128)
    tk = _pick_tile(K, tk_cap, 128)
    grid = (M // tm, N // tn, K // tk)

    x_spec = pl.BlockSpec((tm, tk), lambda i, j, k: (i, k))
    w_spec = pl.BlockSpec((tk, tn), lambda i, j, k: (k, j))
    b_spec = pl.BlockSpec((1, tn), lambda i, j, k: (0, j))
    o_spec = pl.BlockSpec((tm, tn), lambda i, j, k: (i, j))
    o_sds = jax.ShapeDtypeStruct((M, N), x2d.dtype)

    return pl.pallas_call(
        functools.partial(_fused_qkv_kernel, q_scale=q_scale),
        out_shape=(o_sds, o_sds, o_sds),
        grid_spec=pltpu.PrefetchScalarGridSpec(
            num_scalar_prefetch=0,
            grid=grid,
            in_specs=[x_spec, w_spec, w_spec, w_spec, b_spec, b_spec, b_spec],
            out_specs=(o_spec, o_spec, o_spec),
            scratch_shapes=[pltpu.VMEM((tm, tn), jnp.float32)] * 3,
        ),
        compiler_params=pltpu.CompilerParams(
            dimension_semantics=("parallel", "parallel", "arbitrary"),
            vmem_limit_bytes=_VMEM_LIMIT),
    )(x2d, wq_t, wk_t, wv_t,
      bq.reshape(1, N), bk.reshape(1, N), bv.reshape(1, N))


# ---------------------------------------------------------------------------
# Kernel 2: tiled linear  y = (x @ W_t + b) * out_scale   (cross-attn path)
# ---------------------------------------------------------------------------
def _linear_kernel(x_ref, w_ref, b_ref, o_ref, acc_ref, *, out_scale):
    kk = pl.program_id(2)

    @pl.when(kk == 0)
    def _():
        acc_ref[...] = jnp.zeros_like(acc_ref)

    acc_ref[...] += jnp.dot(x_ref[...], w_ref[...],
                            preferred_element_type=jnp.float32)

    @pl.when(kk == pl.num_programs(2) - 1)
    def _():
        o_ref[...] = ((acc_ref[...] + b_ref[...].astype(jnp.float32))
                      * out_scale).astype(o_ref.dtype)


def pallas_linear(x2d, w_t, b, *, out_scale=1.0,
                  tm_cap=512, tn_cap=512, tk_cap=512):
    M, K = x2d.shape
    N = w_t.shape[1]
    tm = _pick_tile(M, tm_cap, 8)
    tn = _pick_tile(N, tn_cap, 128)
    tk = _pick_tile(K, tk_cap, 128)
    grid = (M // tm, N // tn, K // tk)

    return pl.pallas_call(
        functools.partial(_linear_kernel, out_scale=out_scale),
        out_shape=jax.ShapeDtypeStruct((M, N), x2d.dtype),
        grid_spec=pltpu.PrefetchScalarGridSpec(
            num_scalar_prefetch=0,
            grid=grid,
            in_specs=[
                pl.BlockSpec((tm, tk), lambda i, j, k: (i, k)),
                pl.BlockSpec((tk, tn), lambda i, j, k: (k, j)),
                pl.BlockSpec((1, tn), lambda i, j, k: (0, j)),
            ],
            out_specs=pl.BlockSpec((tm, tn), lambda i, j, k: (i, j)),
            scratch_shapes=[pltpu.VMEM((tm, tn), jnp.float32)],
        ),
        compiler_params=pltpu.CompilerParams(
            dimension_semantics=("parallel", "parallel", "arbitrary"),
            vmem_limit_bytes=_VMEM_LIMIT),
    )(x2d, w_t, b.reshape(1, N))


# ---------------------------------------------------------------------------
# Kernel 3: flash-style attention with online softmax (unmasked, matching
# the reference's non-in-place masked_fill).  q arrives pre-scaled by
# 1/sqrt(D); k arrives as (B, H, D, T) so no per-step transpose is needed.
# ---------------------------------------------------------------------------
def _flash_attn_kernel(q_ref, kt_ref, v_ref, o_ref, m_ref, l_ref, acc_ref,
                       *, exp_dtype):
    ki = pl.program_id(3)

    @pl.when(ki == 0)
    def _():
        m_ref[...] = jnp.full_like(m_ref, -jnp.inf)
        l_ref[...] = jnp.zeros_like(l_ref)
        acc_ref[...] = jnp.zeros_like(acc_ref)

    q = q_ref[0, 0]          # (tq, D), already scaled by 1/sqrt(D)
    kt = kt_ref[0, 0]        # (D, tkv) -- canonical MXU RHS orientation
    v = v_ref[0, 0]          # (tkv, D)

    # s = q @ k^T, f32 accumulation on the MXU.
    s = jnp.dot(q, kt, preferred_element_type=jnp.float32)     # (tq, tkv)

    m_prev = m_ref[...]
    m_new = jnp.maximum(m_prev, jnp.max(s, axis=-1, keepdims=True))
    alpha = jnp.exp(m_prev - m_new)                             # (tq, 1), f32
    # Exponentials in the compute dtype: bf16 on bf16 inputs (2x EUP on
    # v6e/v7x; roughly neutral on v5e).  Running sum / accumulator stay f32.
    p = jnp.exp((s - m_new).astype(exp_dtype))                  # (tq, tkv)

    l_ref[...] = alpha * l_ref[...] + jnp.sum(
        p.astype(jnp.float32), axis=-1, keepdims=True)
    acc_ref[...] = alpha * acc_ref[...] + jnp.dot(
        p.astype(v.dtype), v, preferred_element_type=jnp.float32)
    m_ref[...] = m_new

    @pl.when(ki == pl.num_programs(3) - 1)
    def _():
        inv_l = pl.reciprocal(l_ref[...], approx=True)   # EUP slot, ~free
        o_ref[0, 0] = (acc_ref[...] * inv_l).astype(o_ref.dtype)


def pallas_flash_attention(q, k_t, v, *, tq_cap=256, tkv_cap=512):
    """q, v: (B, H, T, D);  k_t: (B, H, D, Tk).  Returns (B, H, T, D)."""
    B, H, T, D = q.shape
    Tk = k_t.shape[3]
    tq = _pick_tile(T, tq_cap, 8)
    tkv = _pick_tile(Tk, tkv_cap, 128)   # lane-dense score/softmax tiles
    grid = (B, H, T // tq, Tk // tkv)
    exp_dtype = jnp.bfloat16 if q.dtype == jnp.bfloat16 else jnp.float32

    q_spec = pl.BlockSpec((1, 1, tq, D), lambda b, h, qi, ki: (b, h, qi, 0))
    kt_spec = pl.BlockSpec((1, 1, D, tkv), lambda b, h, qi, ki: (b, h, 0, ki))
    v_spec = pl.BlockSpec((1, 1, tkv, D), lambda b, h, qi, ki: (b, h, ki, 0))

    return pl.pallas_call(
        functools.partial(_flash_attn_kernel, exp_dtype=exp_dtype),
        out_shape=jax.ShapeDtypeStruct((B, H, T, D), q.dtype),
        grid_spec=pltpu.PrefetchScalarGridSpec(
            num_scalar_prefetch=0,
            grid=grid,
            in_specs=[q_spec, kt_spec, v_spec],
            out_specs=q_spec,
            scratch_shapes=[
                pltpu.VMEM((tq, 1), jnp.float32),   # running max m
                pltpu.VMEM((tq, 1), jnp.float32),   # running sum l
                pltpu.VMEM((tq, D), jnp.float32),   # output accumulator
            ],
        ),
        compiler_params=pltpu.CompilerParams(
            dimension_semantics=("parallel", "parallel", "parallel", "arbitrary"),
            vmem_limit_bytes=_VMEM_LIMIT),
    )(q, k_t, v)


# ---------------------------------------------------------------------------
# Kernel 4: fused head-merge + output projection.
#   out[b, t, :] = sum_h  y[b, h, t, :] @ Wp_t[h*D:(h+1)*D, :]  + b
# Reads y directly in (B, H, T, D) layout -> no XLA merge transpose.
# ---------------------------------------------------------------------------
def _merge_proj_kernel(y_ref, w_ref, b_ref, o_ref, acc_ref):
    h = pl.program_id(3)

    @pl.when(h == 0)
    def _():
        acc_ref[...] = jnp.zeros_like(acc_ref)

    acc_ref[...] += jnp.dot(y_ref[0, 0], w_ref[0],
                            preferred_element_type=jnp.float32)

    @pl.when(h == pl.num_programs(3) - 1)
    def _():
        o_ref[0] = (acc_ref[...] + b_ref[...].astype(jnp.float32)).astype(o_ref.dtype)


def pallas_merge_heads_proj(y, wproj_t, bproj, *, tq_cap=256, tn_cap=512):
    """y: (B, H, T, D);  wproj_t: (H*D, C);  returns (B, T, C)."""
    B, H, T, D = y.shape
    C = wproj_t.shape[1]
    tq = _pick_tile(T, tq_cap, 8)
    tn = _pick_tile(C, tn_cap, 128)
    # (H*D, C) -> (H, D, C) is a free row-major view (row index = h*D + d).
    w3 = wproj_t.reshape(H, D, C)
    grid = (B, T // tq, C // tn, H)

    return pl.pallas_call(
        _merge_proj_kernel,
        out_shape=jax.ShapeDtypeStruct((B, T, C), y.dtype),
        grid_spec=pltpu.PrefetchScalarGridSpec(
            num_scalar_prefetch=0,
            grid=grid,
            in_specs=[
                pl.BlockSpec((1, 1, tq, D), lambda b, qi, j, h: (b, h, qi, 0)),
                pl.BlockSpec((1, D, tn), lambda b, qi, j, h: (h, 0, j)),
                pl.BlockSpec((1, tn), lambda b, qi, j, h: (0, j)),
            ],
            out_specs=pl.BlockSpec((1, tq, tn), lambda b, qi, j, h: (b, qi, j)),
            scratch_shapes=[pltpu.VMEM((tq, tn), jnp.float32)],
        ),
        compiler_params=pltpu.CompilerParams(
            dimension_semantics=("parallel", "parallel", "parallel", "arbitrary"),
            vmem_limit_bytes=_VMEM_LIMIT),
    )(y, w3, bproj.reshape(1, C))


# ---------------------------------------------------------------------------
# Module-equivalent forward
# ---------------------------------------------------------------------------
def init_params(key, n_embd, n_head, scale=0.02):
    ks = jax.random.split(key, 4)
    # torch nn.Linear layout is (out_features, in_features); pre-transpose
    # once here (layout plumbing) so kernels consume (in, out) directly.
    wq = jax.random.normal(ks[0], (n_embd, n_embd), jnp.float32) * scale
    wk = jax.random.normal(ks[1], (n_embd, n_embd), jnp.float32) * scale
    wv = jax.random.normal(ks[2], (n_embd, n_embd), jnp.float32) * scale
    wp = jax.random.normal(ks[3], (n_embd, n_embd), jnp.float32) * scale
    return {
        "wq_t": wq.T, "wk_t": wk.T, "wv_t": wv.T, "wproj_t": wp.T,
        "bq": jnp.zeros((n_embd,), jnp.float32),
        "bk": jnp.zeros((n_embd,), jnp.float32),
        "bv": jnp.zeros((n_embd,), jnp.float32),
        "bproj": jnp.zeros((n_embd,), jnp.float32),
        "n_head": n_head,
    }


def _cast_params(params, dtype):
    out = {}
    for key, val in params.items():
        if isinstance(val, jnp.ndarray) and jnp.issubdtype(val.dtype, jnp.floating):
            out[key] = val.astype(dtype)
        else:
            out[key] = val
    return out


def casual_self_attention(params, x, causal=None, encoded_input=None):
    B, T, C = x.shape
    H = params["n_head"]
    D = C // H
    scale = 1.0 / math.sqrt(D)
    x2d = x.reshape(B * T, C)

    if encoded_input is None:
        # Fused QKV: x read from HBM once; 1/sqrt(D) folded into Q at finalize.
        q2d, k2d, v2d = pallas_fused_qkv(
            x2d, params["wq_t"], params["wk_t"], params["wv_t"],
            params["bq"], params["bk"], params["bv"], q_scale=scale)
    else:
        # Cross-attention path: Q from x, K/V from the encoder output.
        e2d = encoded_input.reshape(B * T, C)
        q2d = pallas_linear(x2d, params["wq_t"], params["bq"], out_scale=scale)
        k2d = pallas_linear(e2d, params["wk_t"], params["bk"])
        v2d = pallas_linear(e2d, params["wv_t"], params["bv"])

    # Head split left to XLA (see TODO above).  K gets the (B, H, D, T)
    # layout -- same one-transpose cost, but the flash kernel then consumes
    # the MXU-canonical RHS orientation with no per-step XLU transpose.
    Q = q2d.reshape(B, T, H, D).transpose(0, 2, 1, 3)    # (B, H, T, D)
    Kt = k2d.reshape(B, T, H, D).transpose(0, 2, 3, 1)   # (B, H, D, T)
    V = v2d.reshape(B, T, H, D).transpose(0, 2, 1, 3)    # (B, H, T, D)

    # NOTE: the reference uses non-in-place masked_fill, so `causal` never
    # changes the output -> unmasked flash attention matches it exactly.
    y = pallas_flash_attention(Q, Kt, V)                 # (B, H, T, D)

    # Fused head-merge + output projection (no XLA merge transpose).
    # attn_drop / resid_drop are identity in deterministic / eval mode.
    return pallas_merge_heads_proj(y, params["wproj_t"], params["bproj"])


# ---------------------------------------------------------------------------
# Pure-JAX reference (f32) for correctness checks
# ---------------------------------------------------------------------------
def reference(params, x, encoded_input=None):
    B, T, C = x.shape
    H = params["n_head"]
    D = C // H
    x = x.astype(jnp.float32)
    kv_in = x if encoded_input is None else encoded_input.astype(jnp.float32)

    def lin(z, w_t, b):
        return z @ w_t.astype(jnp.float32) + b.astype(jnp.float32)

    def split_heads(z):
        return z.reshape(B, T, H, D).transpose(0, 2, 1, 3)

    Q = split_heads(lin(x, params["wq_t"], params["bq"]))
    K = split_heads(lin(kv_in, params["wk_t"], params["bk"]))
    V = split_heads(lin(kv_in, params["wv_t"], params["bv"]))
    att = jnp.einsum("bhqd,bhkd->bhqk", Q, K) / math.sqrt(D)
    att = jax.nn.softmax(att, axis=-1)
    y = jnp.einsum("bhqk,bhkd->bhqd", att, V)
    y = y.transpose(0, 2, 1, 3).reshape(B, T, C)
    return lin(y, params["wproj_t"], params["bproj"])


if __name__ == "__main__":
    key = jax.random.PRNGKey(0)

    # --- Test 1: small shapes consistent with the module (f32) -------------
    B, T, C, H = 2, 8, 32, 4
    pkey, xkey, key = jax.random.split(key, 3)
    params = init_params(pkey, C, H)
    x = jax.random.normal(xkey, (B, T, C), jnp.float32)

    y = jax.block_until_ready(casual_self_attention(params, x, causal=True))
    y_ref = reference(params, x)
    assert y.shape == (B, T, C)
    assert jnp.allclose(y, y_ref, atol=1e-2, rtol=1e-2), "small f32 mismatch"

    # --- Test 2: moderate shape exercising multi-block tiling (f32) --------
    B2, T2, C2, H2 = 2, 256, 512, 8
    pkey2, xkey2, key = jax.random.split(key, 3)
    params2 = init_params(pkey2, C2, H2)
    x2 = jax.random.normal(xkey2, (B2, T2, C2), jnp.float32)

    y2 = jax.block_until_ready(casual_self_attention(params2, x2))
    y2_ref = reference(params2, x2)
    assert y2.shape == (B2, T2, C2)
    assert jnp.allclose(y2, y2_ref, atol=1e-3, rtol=1e-2), "tiled f32 mismatch"

    # --- Test 3: bf16 path (MXU-friendly operands, f32 accumulation) -------
    params_bf16 = _cast_params(params2, jnp.bfloat16)
    x_bf16 = x2.astype(jnp.bfloat16)
    y_bf16 = jax.block_until_ready(casual_self_attention(params_bf16, x_bf16))
    y_bf16_f32 = y_bf16.astype(jnp.float32)
    assert y_bf16.dtype == jnp.bfloat16
    assert bool(jnp.all(jnp.isfinite(y_bf16_f32)))
    assert jnp.allclose(y_bf16_f32, y2_ref, atol=2e-2, rtol=2e-2), "bf16 mismatch"

    print("KERNEL_OK")
</pallas_src>

<mosaic_0001>
module attributes {stable_mosaic.version = 11 : i64} {
  func.func @_fused_qkv_kernel(%arg0: i32, %arg1: i32, %arg2: i32, %arg3: memref<16x32xf32, #tpu.memory_space<vmem>>, %arg4: memref<32x32xf32, #tpu.memory_space<vmem>>, %arg5: memref<32x32xf32, #tpu.memory_space<vmem>>, %arg6: memref<32x32xf32, #tpu.memory_space<vmem>>, %arg7: memref<1x32xf32, #tpu.memory_space<vmem>>, %arg8: memref<1x32xf32, #tpu.memory_space<vmem>>, %arg9: memref<1x32xf32, #tpu.memory_space<vmem>>, %arg10: memref<16x32xf32, #tpu.memory_space<vmem>>, %arg11: memref<16x32xf32, #tpu.memory_space<vmem>>, %arg12: memref<16x32xf32, #tpu.memory_space<vmem>>, %arg13: memref<16x32xf32, #tpu.memory_space<vmem>>, %arg14: memref<16x32xf32, #tpu.memory_space<vmem>>, %arg15: memref<16x32xf32, #tpu.memory_space<vmem>>) attributes {dimension_semantics = [#tpu.dimension_semantics<parallel>, #tpu.dimension_semantics<parallel>, #tpu.dimension_semantics<arbitrary>], iteration_bounds = array<i64: 1, 1, 1>, scalar_prefetch = 0 : i64, scratch_operands = 3 : i64, tpu.core_type = #tpu.core_type<tc>, window_params = [{transform_indices = @transform_0, window_bounds = array<i64: 16, 32>}, {transform_indices = @transform_1, window_bounds = array<i64: 32, 32>}, {transform_indices = @transform_2, window_bounds = array<i64: 32, 32>}, {transform_indices = @transform_3, window_bounds = array<i64: 32, 32>}, {transform_indices = @transform_4, window_bounds = array<i64: 1, 32>}, {transform_indices = @transform_5, window_bounds = array<i64: 1, 32>}, {transform_indices = @transform_6, window_bounds = array<i64: 1, 32>}, {transform_indices = @transform_7, window_bounds = array<i64: 16, 32>}, {transform_indices = @transform_8, window_bounds = array<i64: 16, 32>}, {transform_indices = @transform_9, window_bounds = array<i64: 16, 32>}]} {
    %c0_i32 = arith.constant 0 : i32
    %0 = arith.cmpi eq, %arg2, %c0_i32 : i32
    %1 = arith.extui %0 : i1 to i32
    %c0_i32_0 = arith.constant 0 : i32
    %2 = arith.cmpi ne, %1, %c0_i32_0 : i32
    scf.if %2 {
      %cst_24 = arith.constant 0.000000e+00 : f32
      %22 = vector.broadcast %cst_24 : f32 to vector<16x32xf32>
      %c0_25 = arith.constant 0 : index
      %c0_26 = arith.constant 0 : index
      %23 = vector.load %arg13[%c0_25, %c0_26] : memref<16x32xf32, #tpu.memory_space<vmem>>, vector<16x32xf32>
      tpu.vector_store %arg13[%c0_25, %c0_26], %22 {strides = array<i32>} : memref<16x32xf32, #tpu.memory_space<vmem>>, vector<16x32xf32>,
      %cst_27 = arith.constant 0.000000e+00 : f32
      %24 = vector.broadcast %cst_27 : f32 to vector<16x32xf32>
      %c0_28 = arith.constant 0 : index
      %c0_29 = arith.constant 0 : index
      %25 = vector.load %arg14[%c0_28, %c0_29] : memref<16x32xf32, #tpu.memory_space<vmem>>, vector<16x32xf32>
      tpu.vector_store %arg14[%c0_28, %c0_29], %24 {strides = array<i32>} : memref<16x32xf32, #tpu.memory_space<vmem>>, vector<16x32xf32>,
      %cst_30 = arith.constant 0.000000e+00 : f32
      %26 = vector.broadcast %cst_30 : f32 to vector<16x32xf32>
      %c0_31 = arith.constant 0 : index
      %c0_32 = arith.constant 0 : index
      %27 = vector.load %arg15[%c0_31, %c0_32] : memref<16x32xf32, #tpu.memory_space<vmem>>, vector<16x32xf32>
      tpu.vector_store %arg15[%c0_31, %c0_32], %26 {strides = array<i32>} : memref<16x32xf32, #tpu.memory_space<vmem>>, vector<16x32xf32>,
    } else {
    }
    %c0 = arith.constant 0 : index
    %c0_1 = arith.constant 0 : index
    %3 = vector.load %arg3[%c0, %c0_1] : memref<16x32xf32, #tpu.memory_space<vmem>>, vector<16x32xf32>
    %c0_2 = arith.constant 0 : index
    %c0_3 = arith.constant 0 : index
    %4 = vector.load %arg13[%c0_2, %c0_3] : memref<16x32xf32, #tpu.memory_space<vmem>>, vector<16x32xf32>
    %c0_4 = arith.constant 0 : index
    %c0_5 = arith.constant 0 : index
    %5 = vector.load %arg4[%c0_4, %c0_5] : memref<32x32xf32, #tpu.memory_space<vmem>>, vector<32x32xf32>
    %cst = arith.constant dense<0.000000e+00> : vector<16x32xf32>
    %6 = tpu.matmul %3, %5, %cst {dimension_numbers = #tpu.dot_dimension_numbers<[1], [0], [0], [1], [0, 0, 1, 1], [], []>} : vector<16x32xf32>, vector<32x32xf32>, vector<16x32xf32> -> vector<16x32xf32>
    %7 = arith.addf %4, %6 : vector<16x32xf32>
    %c0_6 = arith.constant 0 : index
    %c0_7 = arith.constant 0 : index
    %8 = vector.load %arg13[%c0_6, %c0_7] : memref<16x32xf32, #tpu.memory_space<vmem>>, vector<16x32xf32>
    tpu.vector_store %arg13[%c0_6, %c0_7], %7 {strides = array<i32>} : memref<16x32xf32, #tpu.memory_space<vmem>>, vector<16x32xf32>,
    %c0_8 = arith.constant 0 : index
    %c0_9 = arith.constant 0 : index
    %9 = vector.load %arg14[%c0_8, %c0_9] : memref<16x32xf32, #tpu.memory_space<vmem>>, vector<16x32xf32>
    %c0_10 = arith.constant 0 : index
    %c0_11 = arith.constant 0 : index
    %10 = vector.load %arg5[%c0_10, %c0_11] : memref<32x32xf32, #tpu.memory_space<vmem>>, vector<32x32xf32>
    %cst_12 = arith.constant dense<0.000000e+00> : vector<16x32xf32>
    %11 = tpu.matmul %3, %10, %cst_12 {dimension_numbers = #tpu.dot_dimension_numbers<[1], [0], [0], [1], [0, 0, 1, 1], [], []>} : vector<16x32xf32>, vector<32x32xf32>, vector<16x32xf32> -> vector<16x32xf32>
    %12 = arith.addf %9, %11 : vector<16x32xf32>
    %c0_13 = arith.constant 0 : index
    %c0_14 = arith.constant 0 : index
    %13 = vector.load %arg14[%c0_13, %c0_14] : memref<16x32xf32, #tpu.memory_space<vmem>>, vector<16x32xf32>
    tpu.vector_store %arg14[%c0_13, %c0_14], %12 {strides = array<i32>} : memref<16x32xf32, #tpu.memory_space<vmem>>, vector<16x32xf32>,
    %c0_15 = arith.constant 0 : index
    %c0_16 = arith.constant 0 : index
    %14 = vector.load %arg15[%c0_15, %c0_16] : memref<16x32xf32, #tpu.memory_space<vmem>>, vector<16x32xf32>
    %c0_17 = arith.constant 0 : index
    %c0_18 = arith.constant 0 : index
    %15 = vector.load %arg6[%c0_17, %c0_18] : memref<32x32xf32, #tpu.memory_space<vmem>>, vector<32x32xf32>
    %cst_19 = arith.constant dense<0.000000e+00> : vector<16x32xf32>
    %16 = tpu.matmul %3, %15, %cst_19 {dimension_numbers = #tpu.dot_dimension_numbers<[1], [0], [0], [1], [0, 0, 1, 1], [], []>} : vector<16x32xf32>, vector<32x32xf32>, vector<16x32xf32> -> vector<16x32xf32>
    %17 = arith.addf %14, %16 : vector<16x32xf32>
    %c0_20 = arith.constant 0 : index
    %c0_21 = arith.constant 0 : index
    %18 = vector.load %arg15[%c0_20, %c0_21] : memref<16x32xf32, #tpu.memory_space<vmem>>, vector<16x32xf32>
    tpu.vector_store %arg15[%c0_20, %c0_21], %17 {strides = array<i32>} : memref<16x32xf32, #tpu.memory_space<vmem>>, vector<16x32xf32>,
    %c0_i32_22 = arith.constant 0 : i32
    %19 = arith.cmpi eq, %arg2, %c0_i32_22 : i32
    %20 = arith.extui %19 : i1 to i32
    %c0_i32_23 = arith.constant 0 : i32
    %21 = arith.cmpi ne, %20, %c0_i32_23 : i32
    scf.if %21 {
      %c0_24 = arith.constant 0 : index
      %c0_25 = arith.constant 0 : index
      %22 = vector.load %arg13[%c0_24, %c0_25] : memref<16x32xf32, #tpu.memory_space<vmem>>, vector<16x32xf32>
      %c0_26 = arith.constant 0 : index
      %c0_27 = arith.constant 0 : index
      %23 = vector.load %arg7[%c0_26, %c0_27] : memref<1x32xf32, #tpu.memory_space<vmem>>, vector<1x32xf32>
      %24 = vector.broadcast %23 : vector<1x32xf32> to vector<16x32xf32>
      %25 = arith.addf %22, %24 : vector<16x32xf32>
      %cst_28 = arith.constant 0.353553385 : f32
      %26 = vector.broadcast %cst_28 : f32 to vector<16x32xf32>
      %27 = arith.mulf %25, %26 : vector<16x32xf32>
      %c0_29 = arith.constant 0 : index
      %c0_30 = arith.constant 0 : index
      %28 = vector.load %arg10[%c0_29, %c0_30] : memref<16x32xf32, #tpu.memory_space<vmem>>, vector<16x32xf32>
      tpu.vector_store %arg10[%c0_29, %c0_30], %27 {strides = array<i32>} : memref<16x32xf32, #tpu.memory_space<vmem>>, vector<16x32xf32>,
      %c0_31 = arith.constant 0 : index
      %c0_32 = arith.constant 0 : index
      %29 = vector.load %arg14[%c0_31, %c0_32] : memref<16x32xf32, #tpu.memory_space<vmem>>, vector<16x32xf32>
      %c0_33 = arith.constant 0 : index
      %c0_34 = arith.constant 0 : index
      %30 = vector.load %arg8[%c0_33, %c0_34] : memref<1x32xf32, #tpu.memory_space<vmem>>, vector<1x32xf32>
      %31 = vector.broadcast %30 : vector<1x32xf32> to vector<16x32xf32>
      %32 = arith.addf %29, %31 : vector<16x32xf32>
      %c0_35 = arith.constant 0 : index
      %c0_36 = arith.constant 0 : index
      %33 = vector.load %arg11[%c0_35, %c0_36] : memref<16x32xf32, #tpu.memory_space<vmem>>, vector<16x32xf32>
      tpu.vector_store %arg11[%c0_35, %c0_36], %32 {strides = array<i32>} : memref<16x32xf32, #tpu.memory_space<vmem>>, vector<16x32xf32>,
      %c0_37 = arith.constant 0 : index
      %c0_38 = arith.constant 0 : index
      %34 = vector.load %arg15[%c0_37, %c0_38] : memref<16x32xf32, #tpu.memory_space<vmem>>, vector<16x32xf32>
      %c0_39 = arith.constant 0 : index
      %c0_40 = arith.constant 0 : index
      %35 = vector.load %arg9[%c0_39, %c0_40] : memref<1x32xf32, #tpu.memory_space<vmem>>, vector<1x32xf32>
      %36 = vector.broadcast %35 : vector<1x32xf32> to vector<16x32xf32>
      %37 = arith.addf %34, %36 : vector<16x32xf32>
      %c0_41 = arith.constant 0 : index
      %c0_42 = arith.constant 0 : index
      %38 = vector.load %arg12[%c0_41, %c0_42] : memref<16x32xf32, #tpu.memory_space<vmem>>, vector<16x32xf32>
      tpu.vector_store %arg12[%c0_41, %c0_42], %37 {strides = array<i32>} : memref<16x32xf32, #tpu.memory_space<vmem>>, vector<16x32xf32>,
    } else {
    }
    return
  }
  func.func @transform_0(%arg0: i32, %arg1: i32, %arg2: i32) -> (i32, i32) {
    %c0_i32 = arith.constant 0 : i32
    return %arg0, %arg2 : i32, i32
  }
  func.func @transform_1(%arg0: i32, %arg1: i32, %arg2: i32) -> (i32, i32) {
    %c0_i32 = arith.constant 0 : i32
    return %arg2, %arg1 : i32, i32
  }
  func.func @transform_2(%arg0: i32, %arg1: i32, %arg2: i32) -> (i32, i32) {
    %c0_i32 = arith.constant 0 : i32
    return %arg2, %arg1 : i32, i32
  }
  func.func @transform_3(%arg0: i32, %arg1: i32, %arg2: i32) -> (i32, i32) {
    %c0_i32 = arith.constant 0 : i32
    return %arg2, %arg1 : i32, i32
  }
  func.func @transform_4(%arg0: i32, %arg1: i32, %arg2: i32) -> (i32, i32) {
    %c0_i32 = arith.constant 0 : i32
    %c0_i32_0 = arith.constant 0 : i32
    return %c0_i32, %arg1 : i32, i32
  }
  func.func @transform_5(%arg0: i32, %arg1: i32, %arg2: i32) -> (i32, i32) {
    %c0_i32 = arith.constant 0 : i32
    %c0_i32_0 = arith.constant 0 : i32
    return %c0_i32, %arg1 : i32, i32
  }
  func.func @transform_6(%arg0: i32, %arg1: i32, %arg2: i32) -> (i32, i32) {
    %c0_i32 = arith.constant 0 : i32
    %c0_i32_0 = arith.constant 0 : i32
    return %c0_i32, %arg1 : i32, i32
  }
  func.func @transform_7(%arg0: i32, %arg1: i32, %arg2: i32) -> (i32, i32) {
    %c0_i32 = arith.constant 0 : i32
    return %arg0, %arg1 : i32, i32
  }
  func.func @transform_8(%arg0: i32, %arg1: i32, %arg2: i32) -> (i32, i32) {
    %c0_i32 = arith.constant 0 : i32
    return %arg0, %arg1 : i32, i32
  }
  func.func @transform_9(%arg0: i32, %arg1: i32, %arg2: i32) -> (i32, i32) {
    %c0_i32 = arith.constant 0 : i32
    return %arg0, %arg1 : i32, i32
  }
}

</mosaic_0001>

<llo_original>
// kernel: tpu_custom_call.1
$region0: #{tpu_custom_call.1}
  #allocation0 [shape = 'u32[]', space=smem, size = 0x4, offset = 0x4, fixed_abs, tag = 'smem constant byte address 0x4 - core index']
  #allocation1 [shape = 'u32[144,128]{1,0:T(1,128)}', space=vmem, size = 0x12000, scoped, tag = 'internal scratch']
  #allocation2 [shape = 'f32[16,32]{1,0:T(8,128)}', space=vmem, size = 0x2000, scoped, tag = 'scratch operand']
  #allocation3 [shape = 'f32[16,32]{1,0:T(8,128)}', space=vmem, size = 0x2000, scoped, tag = 'scratch operand']
  #allocation4 [shape = 'f32[16,32]{1,0:T(8,128)}', space=vmem, size = 0x2000, scoped, tag = 'scratch operand']
  %s0 = inlined_call_operand.hbm [shape: f32[16,32], index: 0, kind: input, shape index: {}]
  %s1 = inlined_call_operand.hbm [shape: f32[32,32], index: 1, kind: input, shape index: {}]
  %s2 = inlined_call_operand.hbm [shape: f32[32,32], index: 2, kind: input, shape index: {}]
  %s3 = inlined_call_operand.hbm [shape: f32[32,32], index: 3, kind: input, shape index: {}]
  %s4 = inlined_call_operand.vmem [shape: f32[1,32], index: 4, kind: input, shape index: {}]
  %s5 = inlined_call_operand.vmem [shape: f32[1,32], index: 5, kind: input, shape index: {}]
  %s6 = inlined_call_operand.vmem [shape: f32[1,32], index: 6, kind: input, shape index: {}]
  %s7 = inlined_call_operand.hbm [shape: f32[16,32], index: 7, kind: output, shape index: {0}]
  %s8 = inlined_call_operand.hbm [shape: f32[16,32], index: 8, kind: output, shape index: {1}]
  %s9 = inlined_call_operand.hbm [shape: f32[16,32], index: 9, kind: output, shape index: {2}]
  %10 = xla_tuple %s7, %s8, %s9
  %s11 = sld [smem:[#allocation0]]
  $region78: #{tpu_custom_call.1} parent=0
    _
  %s13 = ssub.s32 1, %s11
  %s14 = scalar_select 0, %s13, %s11
  $region1: #{tpu_custom_call.1} parent=0
    #allocation5 [shape = 'u8[8192]{0}', space=vmem, size = 0x2000, scoped, tag = 'input window, operand 0, single buffered']
    #allocation6 [shape = 's32[1]{0}', space=sflag, size = 0x4, scoped, tag = 'scoped memory for tpu_custom_call.1']
    #allocation7 [shape = 's32[1]{0}', space=sflag, size = 0x4, scoped, tag = 'scoped memory for tpu_custom_call.1']
    #allocation8 [shape = 'u8[16384]{0}', space=vmem, size = 0x4000, scoped, tag = 'input window, operand 1, single buffered']
    #allocation9 [shape = 's32[1]{0}', space=sflag, size = 0x4, scoped, tag = 'scoped memory for tpu_custom_call.1']
    #allocation10 [shape = 'u8[16384]{0}', space=vmem, size = 0x4000, scoped, tag = 'input window, operand 2, single buffered']
    #allocation11 [shape = 'u8[16384]{0}', space=vmem, size = 0x4000, scoped, tag = 'input window, operand 3, single buffered']
    #allocation12 [shape = 's32[1]{0}', space=sflag, size = 0x4, scoped, tag = 'scoped memory for tpu_custom_call.1']
    #allocation13 [shape = 'u8[8192]{0}', space=vmem, size = 0x2000, scoped, tag = 'output window, operand 0, single buffered']
    #allocation14 [shape = 'u8[8192]{0}', space=vmem, size = 0x2000, scoped, tag = 'output window, operand 1, single buffered']
    #allocation15 [shape = 's32[1]{0}', space=sflag, size = 0x4, scoped, tag = 'scoped memory for tpu_custom_call.1']
    #allocation16 [shape = 'u8[8192]{0}', space=vmem, size = 0x2000, scoped, tag = 'output window, operand 2, single buffered']
    %15 = vsyncpa [#allocation6], 0
    %16 = vsyncpa [#allocation9], 0
    %17 = vsyncpa [#allocation12], 0
    %18 = vsyncpa [#allocation7], 0
    %19 = vsyncpa [#allocation15], 0
    // Predicated region
    $region2: #{tpu_custom_call.1} parent=1 // pred_check
      _
    $region3: #{tpu_custom_call.1} parent=1 // pred_check_branch
      %21 = sbr.rel (0) target = $region5
    $region4: #{tpu_custom_call.1} parent=1 // pred_region
      %s23 = ssub.s32 256, 256
      %24 = vsyncadd [#allocation6], %s23
      %s25 = sshll.u32 [#allocation5], 4
      %s26 = int_to_ptr.vmem [resolvable:$true] %s25
      %31 = dma.hbm_to_vmem [thread:$0]  %s0, 256, %s26, [#allocation6], 128, 128, 8
    $region5: #{tpu_custom_call.1} parent=1 // pred_fallthru
      _
    // Predicated region
    $region6: #{tpu_custom_call.1} parent=1 // pred_check
      _
    $region7: #{tpu_custom_call.1} parent=1 // pred_check_branch
      %33 = sbr.rel (0) target = $region9
    $region8: #{tpu_custom_call.1} parent=1 // pred_region
      %s35 = ssub.s32 512, 512
      %36 = vsyncadd [#allocation9], %s35
      %s37 = sshll.u32 [#allocation8], 4
      %s38 = int_to_ptr.vmem [resolvable:$true] %s37
      %43 = dma.hbm_to_vmem [thread:$0]  %s1, 512, %s38, [#allocation9], 128, 128, 8
    $region9: #{tpu_custom_call.1} parent=1 // pred_fallthru
      _
    // Predicated region
    $region10: #{tpu_custom_call.1} parent=1 // pred_check
      _
    $region11: #{tpu_custom_call.1} parent=1 // pred_check_branch
      %45 = sbr.rel (0) target = $region13
    $region12: #{tpu_custom_call.1} parent=1 // pred_region
      %s47 = ssub.s32 512, 512
      %48 = vsyncadd [#allocation9], %s47
      %s49 = sshll.u32 [#allocation10], 4
      %s50 = int_to_ptr.vmem [resolvable:$true] %s49
      %55 = dma.hbm_to_vmem [thread:$0]  %s2, 512, %s50, [#allocation9], 128, 128, 8
    $region13: #{tpu_custom_call.1} parent=1 // pred_fallthru
      _
    // Predicated region
    $region14: #{tpu_custom_call.1} parent=1 // pred_check
      _
    $region15: #{tpu_custom_call.1} parent=1 // pred_check_branch
      %57 = sbr.rel (0) target = $region17
    $region16: #{tpu_custom_call.1} parent=1 // pred_region
      %s59 = ssub.s32 512, 512
      %60 = vsyncadd [#allocation12], %s59
      %s61 = sshll.u32 [#allocation11], 4
      %s62 = int_to_ptr.vmem [resolvable:$true] %s61
      %67 = dma.hbm_to_vmem [thread:$0]  %s3, 512, %s62, [#allocation12], 128, 128, 8
    $region17: #{tpu_custom_call.1} parent=1 // pred_fallthru
      _
    // Predicated region
    $region18: #{tpu_custom_call.1} parent=1 // pred_check
      _
    $region19: #{tpu_custom_call.1} parent=1 // pred_check_branch
      %69 = sbr.rel (0) target = $region21
    $region20: #{tpu_custom_call.1} parent=1 // pred_region
      _
    $region21: #{tpu_custom_call.1} parent=1 // pred_fallthru
      _
    // Predicated region
    $region22: #{tpu_custom_call.1} parent=1 // pred_check
      _
    $region23: #{tpu_custom_call.1} parent=1 // pred_check_branch
      %71 = sbr.rel (0) target = $region25
    $region24: #{tpu_custom_call.1} parent=1 // pred_region
      _
    $region25: #{tpu_custom_call.1} parent=1 // pred_fallthru
      _
    // Predicated region
    $region26: #{tpu_custom_call.1} parent=1 // pred_check
      _
    $region27: #{tpu_custom_call.1} parent=1 // pred_check_branch
      %73 = sbr.rel (0) target = $region29
    $region28: #{tpu_custom_call.1} parent=1 // pred_region
      _
    $region29: #{tpu_custom_call.1} parent=1 // pred_fallthru
      _
    // Predicated region
    $region30: #{tpu_custom_call.1} parent=1 // pred_check
      _
    $region31: #{tpu_custom_call.1} parent=1 // pred_check_branch
      %75 = sbr.rel (0) target = $region33
    $region32: #{tpu_custom_call.1} parent=1 // pred_region
      %76 = dma.done [#allocation6], 256
    $region33: #{tpu_custom_call.1} parent=1 // pred_fallthru
      _
    // Predicated region
    $region34: #{tpu_custom_call.1} parent=1 // pred_check
      _
    $region35: #{tpu_custom_call.1} parent=1 // pred_check_branch
      %78 = sbr.rel (0) target = $region37
    $region36: #{tpu_custom_call.1} parent=1 // pred_region
      %79 = dma.done [#allocation9], 512
    $region37: #{tpu_custom_call.1} parent=1 // pred_fallthru
      _
    // Predicated region
    $region38: #{tpu_custom_call.1} parent=1 // pred_check
      _
    $region39: #{tpu_custom_call.1} parent=1 // pred_check_branch
      %81 = sbr.rel (0) target = $region41
    $region40: #{tpu_custom_call.1} parent=1 // pred_region
      %82 = dma.done [#allocation9], 512
    $region41: #{tpu_custom_call.1} parent=1 // pred_fallthru
      _
    // Predicated region
    $region42: #{tpu_custom_call.1} parent=1 // pred_check
      _
    $region43: #{tpu_custom_call.1} parent=1 // pred_check_branch
      %84 = sbr.rel (0) target = $region45
    $region44: #{tpu_custom_call.1} parent=1 // pred_region
      %85 = dma.done [#allocation12], 512
    $region45: #{tpu_custom_call.1} parent=1 // pred_fallthru
      _
    %p86 = scmp.eq.s32.totalorder 0, 0
    // Predicated region
    $region46: #{tpu_custom_call.1} parent=1 // pred_check
      %p87 = pneg %p86
    $region47: #{tpu_custom_call.1} parent=1 // pred_check_branch
      %89 = sbr.rel (%p87) target = $region49
    $region48: #{tpu_custom_call.1} parent=1 // pred_region
      %vm90 = vcmask 261120
      %91 = vst.msk [vmem:[#allocation2] sm:$0xff] %vm90, 0.0
      %92 = vst.msk [vmem:[#allocation2 + $0x8] sm:$0xff] %vm90, 0.0
      %93 = vst.msk [vmem:[#allocation3] sm:$0xff] %vm90, 0.0
      %94 = vst.msk [vmem:[#allocation3 + $0x8] sm:$0xff] %vm90, 0.0
      %95 = vst.msk [vmem:[#allocation4] sm:$0xff] %vm90, 0.0
      %96 = vst.msk [vmem:[#allocation4 + $0x8] sm:$0xff] %vm90, 0.0
    $region49: #{tpu_custom_call.1} parent=1 // pred_fallthru
      _
    %v97 = vld [vmem:[#allocation5] sm:$0xff]
    %v98 = vld [vmem:[#allocation5 + $0x8] sm:$0xff]
    %v99 = vld [vmem:[#allocation2] sm:$0xff]
    %v100 = vld [vmem:[#allocation2 + $0x8] sm:$0xff]
    %v101 = vld [vmem:[#allocation8] sm:$0xff]
    %v102 = vld [vmem:[#allocation8 + $0x8] sm:$0xff]
    %v103 = vld [vmem:[#allocation8 + $0x10] sm:$0xff]
    %v104 = vld [vmem:[#allocation8 + $0x18] sm:$0xff]
    %vm105 = vcmask 261120
    %v107 = vsel %vm105, %v97, 0
    %v110 = vsel %vm105, %v98, 0
    %112 = vmatprep.subr.mxu0 0.0
    %113 = vmatpush1.msra.mxu0 0.0
    %114 = vmatprep.subr.mxu0 0.0
    %115 = vmatpush1.msra.mxu0 0.0
    %116 = vmatprep.subr.mxu0 0.0
    %117 = vmatpush1.msra.mxu0 0.0
    %118 = vmatprep.subr.mxu0 0.0
    %119 = vmatpush1.msra.mxu0 0.0
    %120 = vmatprep.subr.mxu0 0.0
    %121 = vmatpush1.msra.mxu0 0.0
    %122 = vmatprep.subr.mxu0 0.0
    %123 = vmatpush1.msra.mxu0 0.0
    %124 = vmatprep.subr.mxu0 0.0
    %125 = vmatpush1.msra.mxu0 0.0
    %126 = vmatprep.subr.mxu0 0.0
    %127 = vmatpush1.msra.mxu0 0.0
    %128 = vmatprep.subr.mxu0 0.0
    %129 = vmatpush1.msra.mxu0 0.0
    %130 = vmatprep.subr.mxu0 0.0
    %131 = vmatpush1.msra.mxu0 0.0
    %132 = vmatprep.subr.mxu0 0.0
    %133 = vmatpush1.msra.mxu0 0.0
    %134 = vmatprep.subr.mxu0 0.0
    %135 = vmatpush1.msra.mxu0 0.0
    %136 = vmatprep.subr.mxu0 0.0
    %137 = vmatpush1.msra.mxu0 %v104
    %138 = vmatprep.subr.mxu0 0.0
    %139 = vmatpush1.msra.mxu0 %v103
    %140 = vmatprep.subr.mxu0 0.0
    %141 = vmatpush1.msra.mxu0 %v102
    %142 = vmatprep.subr.mxu0 0.0
    %143 = vmatpush1.msra.mxu0 %v101
    %144 = vmatprep.subr.mxu0 0.0
    %145 = vmatpush2.msra.mxu0 0.0
    %146 = vmatprep.subr.mxu0 0.0
    %147 = vmatpush2.msra.mxu0 0.0
    %148 = vmatprep.subr.mxu0 0.0
    %149 = vmatpush2.msra.mxu0 0.0
    %150 = vmatprep.subr.mxu0 0.0
    %151 = vmatpush2.msra.mxu0 0.0
    %152 = vmatprep.subr.mxu0 0.0
    %153 = vmatpush2.msra.mxu0 0.0
    %154 = vmatprep.subr.mxu0 0.0
    %155 = vmatpush2.msra.mxu0 0.0
    %156 = vmatprep.subr.mxu0 0.0
    %157 = vmatpush2.msra.mxu0 0.0
    %158 = vmatprep.subr.mxu0 0.0
    %159 = vmatpush2.msra.mxu0 0.0
    %160 = vmatprep.subr.mxu0 0.0
    %161 = vmatpush2.msra.mxu0 0.0
    %162 = vmatprep.subr.mxu0 0.0
    %163 = vmatpush2.msra.mxu0 0.0
    %164 = vmatprep.subr.mxu0 0.0
    %165 = vmatpush2.msra.mxu0 0.0
    %166 = vmatprep.subr.mxu0 0.0
    %167 = vmatpush2.msra.mxu0 0.0
    %168 = vmatprep.subr.mxu0 0.0
    %169 = vmatpush2.msra.mxu0 0.0
    %170 = vmatprep.subr.mxu0 0.0
    %171 = vmatpush2.msra.mxu0 0.0
    %172 = vmatprep.subr.mxu0 0.0
    %173 = vmatpush2.msra.mxu0 0.0
    %174 = vmatprep.subr.mxu0 0.0
    %175 = vmatpush2.msra.mxu0 0.0
    %176 = vmatprep.mubr.f32.mxu0 0.0
    %177 = vmatmul.mubr.f32.gmra.mxu0 %v107
    %v178 = vpop.f32.mrf.mxu0
    %v179 = vadd.f32 0.0, %v178
    %v180 = vpop.f32.mrf.mxu0
    %181 = vmatprep.mubr.f32.mxu0 0.0
    %182 = vmatmul.mubr.f32.gmra.mxu0 %v110
    %v183 = vpop.f32.mrf.mxu0
    %v184 = vadd.f32 0.0, %v183
    %v185 = vpop.f32.mrf.mxu0
    %186 = vdwg.mxu0
    %v187 = vadd.f32 %v99, %v179
    %v188 = vadd.f32 %v100, %v184
    %189 = vst.msk [vmem:[#allocation2] sm:$0xff] %vm105, %v187
    %190 = vst.msk [vmem:[#allocation2 + $0x8] sm:$0xff] %vm105, %v188
    %v191 = vld [vmem:[#allocation3] sm:$0xff]
    %v192 = vld [vmem:[#allocation3 + $0x8] sm:$0xff]
    %v193 = vld [vmem:[#allocation10] sm:$0xff]
    %v194 = vld [vmem:[#allocation10 + $0x8] sm:$0xff]
    %v195 = vld [vmem:[#allocation10 + $0x10] sm:$0xff]
    %v196 = vld [vmem:[#allocation10 + $0x18] sm:$0xff]
    %197 = vmatprep.subr.mxu0 0.0
    %198 = vmatpush1.msra.mxu0 0.0
    %199 = vmatprep.subr.mxu0 0.0
    %200 = vmatpush1.msra.mxu0 0.0
    %201 = vmatprep.subr.mxu0 0.0
    %202 = vmatpush1.msra.mxu0 0.0
    %203 = vmatprep.subr.mxu0 0.0
    %204 = vmatpush1.msra.mxu0 0.0
    %205 = vmatprep.subr.mxu0 0.0
    %206 = vmatpush1.msra.mxu0 0.0
    %207 = vmatprep.subr.mxu0 0.0
    %208 = vmatpush1.msra.mxu0 0.0
    %209 = vmatprep.subr.mxu0 0.0
    %210 = vmatpush1.msra.mxu0 0.0
    %211 = vmatprep.subr.mxu0 0.0
    %212 = vmatpush1.msra.mxu0 0.0
    %213 = vmatprep.subr.mxu0 0.0
    %214 = vmatpush1.msra.mxu0 0.0
    %215 = vmatprep.subr.mxu0 0.0
    %216 = vmatpush1.msra.mxu0 0.0
    %217 = vmatprep.subr.mxu0 0.0
    %218 = vmatpush1.msra.mxu0 0.0
    %219 = vmatprep.subr.mxu0 0.0
    %220 = vmatpush1.msra.mxu0 0.0
    %221 = vmatprep.subr.mxu0 0.0
    %222 = vmatpush1.msra.mxu0 %v196
    %223 = vmatprep.subr.mxu0 0.0
    %224 = vmatpush1.msra.mxu0 %v195
    %225 = vmatprep.subr.mxu0 0.0
    %226 = vmatpush1.msra.mxu0 %v194
    %227 = vmatprep.subr.mxu0 0.0
    %228 = vmatpush1.msra.mxu0 %v193
    %229 = vmatprep.subr.mxu0 0.0
    %230 = vmatpush2.msra.mxu0 0.0
    %231 = vmatprep.subr.mxu0 0.0
    %232 = vmatpush2.msra.mxu0 0.0
    %233 = vmatprep.subr.mxu0 0.0
    %234 = vmatpush2.msra.mxu0 0.0
    %235 = vmatprep.subr.mxu0 0.0
    %236 = vmatpush2.msra.mxu0 0.0
    %237 = vmatprep.subr.mxu0 0.0
    %238 = vmatpush2.msra.mxu0 0.0
    %239 = vmatprep.subr.mxu0 0.0
    %240 = vmatpush2.msra.mxu0 0.0
    %241 = vmatprep.subr.mxu0 0.0
    %242 = vmatpush2.msra.mxu0 0.0
    %243 = vmatprep.subr.mxu0 0.0
    %244 = vmatpush2.msra.mxu0 0.0
    %245 = vmatprep.subr.mxu0 0.0
    %246 = vmatpush2.msra.mxu0 0.0
    %247 = vmatprep.subr.mxu0 0.0
    %248 = vmatpush2.msra.mxu0 0.0
    %249 = vmatprep.subr.mxu0 0.0
    %250 = vmatpush2.msra.mxu0 0.0
    %251 = vmatprep.subr.mxu0 0.0
    %252 = vmatpush2.msra.mxu0 0.0
    %253 = vmatprep.subr.mxu0 0.0
    %254 = vmatpush2.msra.mxu0 0.0
    %255 = vmatprep.subr.mxu0 0.0
    %256 = vmatpush2.msra.mxu0 0.0
    %257 = vmatprep.subr.mxu0 0.0
    %258 = vmatpush2.msra.mxu0 0.0
    %259 = vmatprep.subr.mxu0 0.0
    %260 = vmatpush2.msra.mxu0 0.0
    %261 = vmatprep.mubr.f32.mxu0 0.0
    %262 = vmatmul.mubr.f32.gmra.mxu0 %v107
    %v263 = vpop.f32.mrf.mxu0
    %v264 = vadd.f32 0.0, %v263
    %v265 = vpop.f32.mrf.mxu0
    %266 = vmatprep.mubr.f32.mxu0 0.0
    %267 = vmatmul.mubr.f32.gmra.mxu0 %v110
    %v268 = vpop.f32.mrf.mxu0
    %v269 = vadd.f32 0.0, %v268
    %v270 = vpop.f32.mrf.mxu0
    %271 = vdwg.mxu0
    %v272 = vadd.f32 %v191, %v264
    %v273 = vadd.f32 %v192, %v269
    %274 = vst.msk [vmem:[#allocation3] sm:$0xff] %vm105, %v272
    %275 = vst.msk [vmem:[#allocation3 + $0x8] sm:$0xff] %vm105, %v273
    %v276 = vld [vmem:[#allocation4] sm:$0xff]
    %v277 = vld [vmem:[#allocation4 + $0x8] sm:$0xff]
    %v278 = vld [vmem:[#allocation11] sm:$0xff]
    %v279 = vld [vmem:[#allocation11 + $0x8] sm:$0xff]
    %v280 = vld [vmem:[#allocation11 + $0x10] sm:$0xff]
    %v281 = vld [vmem:[#allocation11 + $0x18] sm:$0xff]
    %282 = vmatprep.subr.mxu0 0.0
    %283 = vmatpush1.msra.mxu0 0.0
    %284 = vmatprep.subr.mxu0 0.0
    %285 = vmatpush1.msra.mxu0 0.0
    %286 = vmatprep.subr.mxu0 0.0
    %287 = vmatpush1.msra.mxu0 0.0
    %288 = vmatprep.subr.mxu0 0.0
    %289 = vmatpush1.msra.mxu0 0.0
    %290 = vmatprep.subr.mxu0 0.0
    %291 = vmatpush1.msra.mxu0 0.0
    %292 = vmatprep.subr.mxu0 0.0
    %293 = vmatpush1.msra.mxu0 0.0
    %294 = vmatprep.subr.mxu0 0.0
    %295 = vmatpush1.msra.mxu0 0.0
    %296 = vmatprep.subr.mxu0 0.0
    %297 = vmatpush1.msra.mxu0 0.0
    %298 = vmatprep.subr.mxu0 0.0
    %299 = vmatpush1.msra.mxu0 0.0
    %300 = vmatprep.subr.mxu0 0.0
    %301 = vmatpush1.msra.mxu0 0.0
    %302 = vmatprep.subr.mxu0 0.0
    %303 = vmatpush1.msra.mxu0 0.0
    %304 = vmatprep.subr.mxu0 0.0
    %305 = vmatpush1.msra.mxu0 0.0
    %306 = vmatprep.subr.mxu0 0.0
    %307 = vmatpush1.msra.mxu0 %v281
    %308 = vmatprep.subr.mxu0 0.0
    %309 = vmatpush1.msra.mxu0 %v280
    %310 = vmatprep.subr.mxu0 0.0
    %311 = vmatpush1.msra.mxu0 %v279
    %312 = vmatprep.subr.mxu0 0.0
    %313 = vmatpush1.msra.mxu0 %v278
    %314 = vmatprep.subr.mxu0 0.0
    %315 = vmatpush2.msra.mxu0 0.0
    %316 = vmatprep.subr.mxu0 0.0
    %317 = vmatpush2.msra.mxu0 0.0
    %318 = vmatprep.subr.mxu0 0.0
    %319 = vmatpush2.msra.mxu0 0.0
    %320 = vmatprep.subr.mxu0 0.0
    %321 = vmatpush2.msra.mxu0 0.0
    %322 = vmatprep.subr.mxu0 0.0
    %323 = vmatpush2.msra.mxu0 0.0
    %324 = vmatprep.subr.mxu0 0.0
    %325 = vmatpush2.msra.mxu0 0.0
    %326 = vmatprep.subr.mxu0 0.0
    %327 = vmatpush2.msra.mxu0 0.0
    %328 = vmatprep.subr.mxu0 0.0
    %329 = vmatpush2.msra.mxu0 0.0
    %330 = vmatprep.subr.mxu0 0.0
    %331 = vmatpush2.msra.mxu0 0.0
    %332 = vmatprep.subr.mxu0 0.0
    %333 = vmatpush2.msra.mxu0 0.0
    %334 = vmatprep.subr.mxu0 0.0
    %335 = vmatpush2.msra.mxu0 0.0
    %336 = vmatprep.subr.mxu0 0.0
    %337 = vmatpush2.msra.mxu0 0.0
    %338 = vmatprep.subr.mxu0 0.0
    %339 = vmatpush2.msra.mxu0 0.0
    %340 = vmatprep.subr.mxu0 0.0
    %341 = vmatpush2.msra.mxu0 0.0
    %342 = vmatprep.subr.mxu0 0.0
    %343 = vmatpush2.msra.mxu0 0.0
    %344 = vmatprep.subr.mxu0 0.0
    %345 = vmatpush2.msra.mxu0 0.0
    %346 = vmatprep.mubr.f32.mxu0 0.0
    %347 = vmatmul.mubr.f32.gmra.mxu0 %v107
    %v348 = vpop.f32.mrf.mxu0
    %v349 = vadd.f32 0.0, %v348
    %v350 = vpop.f32.mrf.mxu0
    %351 = vmatprep.mubr.f32.mxu0 0.0
    %352 = vmatmul.mubr.f32.gmra.mxu0 %v110
    %v353 = vpop.f32.mrf.mxu0
    %v354 = vadd.f32 0.0, %v353
    %v355 = vpop.f32.mrf.mxu0
    %356 = vdwg.mxu0
    %v357 = vadd.f32 %v276, %v349
    %v358 = vadd.f32 %v277, %v354
    %359 = vst.msk [vmem:[#allocation4] sm:$0xff] %vm105, %v357
    %360 = vst.msk [vmem:[#allocation4 + $0x8] sm:$0xff] %vm105, %v358
    // Predicated region
    $region50: #{tpu_custom_call.1} parent=1 // pred_check
      %p361 = pneg %p86
    $region51: #{tpu_custom_call.1} parent=1 // pred_check_branch
      %363 = sbr.rel (%p361) target = $region53
    $region52: #{tpu_custom_call.1} parent=1 // pred_region
      %v364 = vld [vmem:[#allocation2] sm:$0xff]
      %v365 = vld [vmem:[#allocation2 + $0x8] sm:$0xff]
      %v366 = vld [vmem:[%s4] sm:$0x1]
      %v368 = vlaneseq
      %v369 = vshrl.u32 %v368, 7
      %v370 = vsub.s32 0, %v369
      %v371 = vrot.slane %v366, %v370
      %v373 = vadd.f32 %v364, %v371
      %v374 = vadd.f32 %v365, %v371
      %v375 = vmul.f32 %v373, 0.35355338
      %v376 = vmul.f32 %v374, 0.35355338
      %377 = vst.msk [vmem:[#allocation13] sm:$0xff] %vm105, %v375
      %378 = vst.msk [vmem:[#allocation13 + $0x8] sm:$0xff] %vm105, %v376
      %v379 = vld [vmem:[#allocation3] sm:$0xff]
      %v380 = vld [vmem:[#allocation3 + $0x8] sm:$0xff]
      %v381 = vld [vmem:[%s5] sm:$0x1]
      %v383 = vlaneseq
      %v384 = vshrl.u32 %v383, 7
      %v385 = vsub.s32 0, %v384
      %v386 = vrot.slane %v381, %v385
      %v388 = vadd.f32 %v379, %v386
      %v389 = vadd.f32 %v380, %v386
      %390 = vst.msk [vmem:[#allocation14] sm:$0xff] %vm105, %v388
      %391 = vst.msk [vmem:[#allocation14 + $0x8] sm:$0xff] %vm105, %v389
      %v392 = vld [vmem:[#allocation4] sm:$0xff]
      %v393 = vld [vmem:[#allocation4 + $0x8] sm:$0xff]
      %v394 = vld [vmem:[%s6] sm:$0x1]
      %v396 = vlaneseq
      %v397 = vshrl.u32 %v396, 7
      %v398 = vsub.s32 0, %v397
      %v399 = vrot.slane %v394, %v398
      %v401 = vadd.f32 %v392, %v399
      %v402 = vadd.f32 %v393, %v399
      %403 = vst.msk [vmem:[#allocation16] sm:$0xff] %vm105, %v401
      %404 = vst.msk [vmem:[#allocation16 + $0x8] sm:$0xff] %vm105, %v402
    $region53: #{tpu_custom_call.1} parent=1 // pred_fallthru
      _
    // Predicated region
    $region54: #{tpu_custom_call.1} parent=1 // pred_check
      _
    $region55: #{tpu_custom_call.1} parent=1 // pred_check_branch
      %406 = sbr.rel (0) target = $region57
    $region56: #{tpu_custom_call.1} parent=1 // pred_region
      %s408 = ssub.s32 256, 256
      %409 = vsyncadd [#allocation7], %s408
      %s410 = sshll.u32 [#allocation13], 4
      %s411 = int_to_ptr.vmem [resolvable:$true] %s410
      %416 = dma.vmem_to_hbm [thread:$0]  %s411, 256, %s7, [#allocation7], 128, 128, 8
    $region57: #{tpu_custom_call.1} parent=1 // pred_fallthru
      _
    // Predicated region
    $region58: #{tpu_custom_call.1} parent=1 // pred_check
      _
    $region59: #{tpu_custom_call.1} parent=1 // pred_check_branch
      %418 = sbr.rel (0) target = $region61
    $region60: #{tpu_custom_call.1} parent=1 // pred_region
      %s420 = ssub.s32 256, 256
      %421 = vsyncadd [#allocation15], %s420
      %s422 = sshll.u32 [#allocation14], 4
      %s423 = int_to_ptr.vmem [resolvable:$true] %s422
      %428 = dma.vmem_to_hbm [thread:$0]  %s423, 256, %s8, [#allocation15], 128, 128, 8
    $region61: #{tpu_custom_call.1} parent=1 // pred_fallthru
      _
    // Predicated region
    $region62: #{tpu_custom_call.1} parent=1 // pred_check
      _
    $region63: #{tpu_custom_call.1} parent=1 // pred_check_branch
      %430 = sbr.rel (0) target = $region65
    $region64: #{tpu_custom_call.1} parent=1 // pred_region
      %s432 = ssub.s32 256, 256
      %433 = vsyncadd [#allocation15], %s432
      %s434 = sshll.u32 [#allocation16], 4
      %s435 = int_to_ptr.vmem [resolvable:$true] %s434
      %440 = dma.vmem_to_hbm [thread:$0]  %s435, 256, %s9, [#allocation15], 128, 128, 8
    $region65: #{tpu_custom_call.1} parent=1 // pred_fallthru
      _
    // Predicated region
    $region66: #{tpu_custom_call.1} parent=1 // pred_check
      _
    $region67: #{tpu_custom_call.1} parent=1 // pred_check_branch
      %442 = sbr.rel (0) target = $region69
    $region68: #{tpu_custom_call.1} parent=1 // pred_region
      %443 = dma.done [#allocation7], 256
    $region69: #{tpu_custom_call.1} parent=1 // pred_fallthru
      _
    // Predicated region
    $region70: #{tpu_custom_call.1} parent=1 // pred_check
      _
    $region71: #{tpu_custom_call.1} parent=1 // pred_check_branch
      %445 = sbr.rel (0) target = $region73
    $region72: #{tpu_custom_call.1} parent=1 // pred_region
      %446 = dma.done [#allocation15], 256
    $region73: #{tpu_custom_call.1} parent=1 // pred_fallthru
      _
    // Predicated region
    $region74: #{tpu_custom_call.1} parent=1 // pred_check
      _
    $region75: #{tpu_custom_call.1} parent=1 // pred_check_branch
      %448 = sbr.rel (0) target = $region77
    $region76: #{tpu_custom_call.1} parent=1 // pred_region
      %449 = dma.done [#allocation15], 256
    $region77: #{tpu_custom_call.1} parent=1 // pred_fallthru
      _
    %450 = vsyncpa [#allocation6], 1
    %451 = vsyncpa [#allocation9], 1
    %452 = vsyncpa [#allocation12], 1
    %453 = vsyncpa [#allocation7], 1
    %454 = vsyncpa [#allocation15], 1

</llo_original>
